<compile_context>
chip_gen: v6e
topology: v6e:2x2x1
jax: 0.10.0
libtpu: 0.0.40
codegen_flags: <defaults>
</compile_context>

<pallas_src>
import functools

import jax
import jax.numpy as jnp
from jax.experimental import pallas as pl
from jax.experimental.pallas import tpu as pltpu


def _round_up(x, m):
    return ((x + m - 1) // m) * m


def actor_kernel(x_ref, w1_ref, b1_ref, w2_ref, b2_ref, w3_ref, b3_ref, o_ref,
                 *, min_action, max_action):
    # Layer 1: Linear(state_num -> 256) + ReLU.  Kept fully f32 (x is not
    # truncated; K = state_num is tiny so this matmul is trivially cheap).
    h1 = jnp.dot(x_ref[...], w1_ref[...], preferred_element_type=jnp.float32)
    h1 = jnp.maximum(h1 + b1_ref[...], 0.0)

    # Layer 2: Linear(256 -> 512) + ReLU.  bf16 weights (dominant bytes),
    # f32 accumulation on the MXU, elementwise math in f32.
    h2 = jnp.dot(h1.astype(jnp.bfloat16), w2_ref[...],
                 preferred_element_type=jnp.float32)
    h2 = jnp.maximum(h2 + b2_ref[...], 0.0)

    # Output layer: Linear(512 -> action_pad) + sigmoid + affine rescale.
    # action_pad is lane-dense (multiple of 128); extra columns are garbage
    # and sliced off in the wrapper.
    logits = jnp.dot(h2.astype(jnp.bfloat16), w3_ref[...],
                     preferred_element_type=jnp.float32)
    logits = logits + b3_ref[...]
    s = jax.nn.sigmoid(logits)
    o_ref[...] = ((max_action - min_action) * s + min_action).astype(o_ref.dtype)


def actor_forward(x, params, action_num, min_action, max_action,
                  *, max_batch_tile=1024):
    """Fused TD3 actor forward.

    params = (w1, b1, w2, b2, w3, b3) as produced by make_kernel_params:
      w1 (state_num, 256) f32, w2 (256, 512) bf16, w3 (512, act_pad) bf16,
      biases (1, out) f32 (b3 padded to act_pad).
    Returns (B, action_num) float32 actions.
    """
    w1, b1, w2, b2, w3, b3 = params
    B, state_num = x.shape
    h1_dim = w1.shape[1]
    h2_dim = w2.shape[1]
    act_pad = w3.shape[1]  # lane-padded output width (multiple of 128)

    # ---- adaptive batch tiling ----
    b_aligned = _round_up(max(B, 1), 8)
    if b_aligned >= 2 * max_batch_tile:
        tb = max_batch_tile                           # many tiles
    elif b_aligned >= 256:
        tb = _round_up(-(-b_aligned // 2), 8)         # exactly 2 tiles (v7x split)
    else:
        tb = None                                     # single full-array tile

    kernel = functools.partial(actor_kernel,
                               min_action=float(min_action),
                               max_action=float(max_action))

    # Weights / biases use a constant block index -> DMA'd once and kept
    # VMEM-resident across all batch tiles.
    weight_specs = [
        pl.BlockSpec((state_num, h1_dim), lambda i: (0, 0)),
        pl.BlockSpec((1, h1_dim), lambda i: (0, 0)),
        pl.BlockSpec((h1_dim, h2_dim), lambda i: (0, 0)),
        pl.BlockSpec((1, h2_dim), lambda i: (0, 0)),
        pl.BlockSpec((h2_dim, act_pad), lambda i: (0, 0)),
        pl.BlockSpec((1, act_pad), lambda i: (0, 0)),
    ]

    if tb is None:
        # Single tile: block shapes equal the full array dims (no padding, no
        # partial blocks).  "arbitrary" so v7x does not mirror the weight DMA
        # into the second core for a 1-tile grid.
        grid = (1,)
        out_rows = B
        x_spec = pl.BlockSpec((B, state_num), lambda i: (0, 0))
        out_spec = pl.BlockSpec((B, act_pad), lambda i: (0, 0))
        dims = ("arbitrary",)
    else:
        num_tiles = pl.cdiv(B, tb)
        grid = (num_tiles,)
        out_rows = num_tiles * tb  # output rounded up; sliced below (no x pad/copy)
        x_spec = pl.BlockSpec((tb, state_num), lambda i: (i, 0))
        out_spec = pl.BlockSpec((tb, act_pad), lambda i: (i, 0))
        dims = ("parallel",)

    out = pl.pallas_call(
        kernel,
        out_shape=jax.ShapeDtypeStruct((out_rows, act_pad), jnp.float32),
        grid=grid,
        in_specs=[x_spec] + weight_specs,
        out_specs=out_spec,
        compiler_params=pltpu.CompilerParams(
            dimension_semantics=dims,
            vmem_limit_bytes=32 * 1024 * 1024,
        ),
    )(x, w1, b1, w2, b2, w3, b3)
    return out[:B, :action_num]


def init_linear(key, fan_in, fan_out):
    """PyTorch nn.Linear default init: U(-1/sqrt(fan_in), 1/sqrt(fan_in))."""
    kw, kb = jax.random.split(key)
    bound = 1.0 / jnp.sqrt(jnp.float32(fan_in))
    # Stored as (in, out) so the kernel does x @ W.
    w = jax.random.uniform(kw, (fan_in, fan_out), jnp.float32, -bound, bound)
    b = jax.random.uniform(kb, (1, fan_out), jnp.float32, -bound, bound)
    return w, b


def make_kernel_params(params_f32, *, lane=128):
    """f32 master params -> kernel layout.

    w1/b1 stay f32 (tiny; keeps layer 1 fully f32).  w2/w3 -> bf16 (dominant
    DMA bytes).  w3/b3 are zero-padded to a multiple of 128 output columns so
    the kernel's output block is lane-dense (unmasked stores).
    """
    w1, b1, w2, b2, w3, b3 = params_f32
    action_num = w3.shape[1]
    act_pad = _round_up(action_num, lane)
    if act_pad != action_num:
        w3 = jnp.pad(w3, ((0, 0), (0, act_pad - action_num)))
        b3 = jnp.pad(b3, ((0, 0), (0, act_pad - action_num)))
    return (w1, b1,
            w2.astype(jnp.bfloat16), b2,
            w3.astype(jnp.bfloat16), b3)


def _reference(x, params_f32, kernel_params, min_action, max_action):
    """Replicates the kernel's math (f32 layer 1, bf16 weights for 2/3)."""
    w1, b1, _, b2, _, b3 = params_f32
    _, _, w2b, _, w3b, _ = kernel_params
    action_num = params_f32[4].shape[1]
    h = jnp.maximum(x @ w1 + b1, 0.0)
    h = jnp.maximum(
        jnp.dot(h.astype(jnp.bfloat16), w2b,
                preferred_element_type=jnp.float32) + b2, 0.0)
    logits = jnp.dot(h.astype(jnp.bfloat16), w3b,
                     preferred_element_type=jnp.float32)[:, :action_num] + b3
    return (max_action - min_action) * jax.nn.sigmoid(logits) + min_action


if __name__ == "__main__":
    state_num = 8
    action_num = 4
    min_action = -2.0
    max_action = 2.0

    key = jax.random.PRNGKey(0)
    k_x, k_x2, k1, k2, k3 = jax.random.split(key, 5)

    w1, b1 = init_linear(k1, state_num, 256)
    w2, b2 = init_linear(k2, 256, 512)
    w3, b3 = init_linear(k3, 512, action_num)
    params_f32 = (w1, b1, w2, b2, w3, b3)
    params = make_kernel_params(params_f32)

    # --- small batch (single-tile path) ---
    batch = 2
    x = jax.random.normal(k_x, (batch, state_num), jnp.float32)
    out = jax.block_until_ready(
        actor_forward(x, params, action_num, min_action, max_action))
    assert out.shape == (batch, action_num)

    ref = _reference(x, params_f32, params, min_action, max_action)
    assert jnp.allclose(out, ref, atol=2e-3, rtol=2e-3), "mismatch (B=2, bf16 ref)"

    h = jnp.maximum(x @ w1 + b1, 0.0)
    h = jnp.maximum(h @ w2 + b2, 0.0)
    ref_f32 = (max_action - min_action) * jax.nn.sigmoid(h @ w3 + b3) + min_action
    assert jnp.allclose(out, ref_f32, atol=3e-2, rtol=3e-2), "mismatch (B=2, f32 ref)"

    # --- medium batch (two-tile "parallel" path, non-divisible B) ---
    batch2 = 300
    x2 = jax.random.normal(k_x2, (batch2, state_num), jnp.float32)
    out2 = jax.block_until_ready(
        actor_forward(x2, params, action_num, min_action, max_action))
    assert out2.shape == (batch2, action_num)
    ref2 = _reference(x2, params_f32, params, min_action, max_action)
    assert jnp.allclose(out2, ref2, atol=2e-3, rtol=2e-3), "mismatch (B=300)"

    print("KERNEL_OK")
</pallas_src>

<mosaic_0001>
module attributes {stable_mosaic.version = 11 : i64} {
  func.func @actor_kernel(%arg0: i32, %arg1: memref<2x8xf32, #tpu.memory_space<vmem>>, %arg2: memref<8x256xf32, #tpu.memory_space<vmem>>, %arg3: memref<1x256xf32, #tpu.memory_space<vmem>>, %arg4: memref<256x512xbf16, #tpu.memory_space<vmem>>, %arg5: memref<1x512xf32, #tpu.memory_space<vmem>>, %arg6: memref<512x128xbf16, #tpu.memory_space<vmem>>, %arg7: memref<1x128xf32, #tpu.memory_space<vmem>>, %arg8: memref<2x128xf32, #tpu.memory_space<vmem>>) attributes {dimension_semantics = [#tpu.dimension_semantics<arbitrary>], iteration_bounds = array<i64: 1>, scalar_prefetch = 0 : i64, scratch_operands = 0 : i64, tpu.core_type = #tpu.core_type<tc>, window_params = [{pipeline_mode = #tpu.pipeline_mode<synchronous>, transform_indices = @transform_0, window_bounds = array<i64: 2, 8>}, {pipeline_mode = #tpu.pipeline_mode<synchronous>, transform_indices = @transform_1, window_bounds = array<i64: 8, 256>}, {pipeline_mode = #tpu.pipeline_mode<synchronous>, transform_indices = @transform_2, window_bounds = array<i64: 1, 256>}, {pipeline_mode = #tpu.pipeline_mode<synchronous>, transform_indices = @transform_3, window_bounds = array<i64: 256, 512>}, {pipeline_mode = #tpu.pipeline_mode<synchronous>, transform_indices = @transform_4, window_bounds = array<i64: 1, 512>}, {pipeline_mode = #tpu.pipeline_mode<synchronous>, transform_indices = @transform_5, window_bounds = array<i64: 512, 128>}, {pipeline_mode = #tpu.pipeline_mode<synchronous>, transform_indices = @transform_6, window_bounds = array<i64: 1, 128>}, {pipeline_mode = #tpu.pipeline_mode<synchronous>, transform_indices = @transform_7, window_bounds = array<i64: 2, 128>}]} {
    %c0 = arith.constant 0 : index
    %c0_0 = arith.constant 0 : index
    %0 = vector.load %arg1[%c0, %c0_0] : memref<2x8xf32, #tpu.memory_space<vmem>>, vector<2x8xf32>
    %c0_1 = arith.constant 0 : index
    %c0_2 = arith.constant 0 : index
    %1 = vector.load %arg2[%c0_1, %c0_2] : memref<8x256xf32, #tpu.memory_space<vmem>>, vector<8x256xf32>
    %cst = arith.constant dense<0.000000e+00> : vector<2x256xf32>
    %2 = tpu.matmul %0, %1, %cst {dimension_numbers = #tpu.dot_dimension_numbers<[1], [0], [0], [1], [0, 0, 1, 1], [], []>} : vector<2x8xf32>, vector<8x256xf32>, vector<2x256xf32> -> vector<2x256xf32>
    %c0_3 = arith.constant 0 : index
    %c0_4 = arith.constant 0 : index
    %3 = vector.load %arg3[%c0_3, %c0_4] : memref<1x256xf32, #tpu.memory_space<vmem>>, vector<1x256xf32>
    %4 = vector.broadcast %3 : vector<1x256xf32> to vector<2x256xf32>
    %5 = arith.addf %2, %4 : vector<2x256xf32>
    %cst_5 = arith.constant 0.000000e+00 : f32
    %6 = vector.broadcast %cst_5 : f32 to vector<2x256xf32>
    %7 = arith.maximumf %5, %6 : vector<2x256xf32>
    %8 = arith.truncf %7 : vector<2x256xf32> to vector<2x256xbf16>
    %c0_6 = arith.constant 0 : index
    %c0_7 = arith.constant 0 : index
    %9 = vector.load %arg4[%c0_6, %c0_7] : memref<256x512xbf16, #tpu.memory_space<vmem>>, vector<256x512xbf16>
    %cst_8 = arith.constant dense<0.000000e+00> : vector<2x512xf32>
    %10 = tpu.matmul %8, %9, %cst_8 {dimension_numbers = #tpu.dot_dimension_numbers<[1], [0], [0], [1], [0, 0, 1, 1], [], []>} : vector<2x256xbf16>, vector<256x512xbf16>, vector<2x512xf32> -> vector<2x512xf32>
    %c0_9 = arith.constant 0 : index
    %c0_10 = arith.constant 0 : index
    %11 = vector.load %arg5[%c0_9, %c0_10] : memref<1x512xf32, #tpu.memory_space<vmem>>, vector<1x512xf32>
    %12 = vector.broadcast %11 : vector<1x512xf32> to vector<2x512xf32>
    %13 = arith.addf %10, %12 : vector<2x512xf32>
    %cst_11 = arith.constant 0.000000e+00 : f32
    %14 = vector.broadcast %cst_11 : f32 to vector<2x512xf32>
    %15 = arith.maximumf %13, %14 : vector<2x512xf32>
    %16 = arith.truncf %15 : vector<2x512xf32> to vector<2x512xbf16>
    %c0_12 = arith.constant 0 : index
    %c0_13 = arith.constant 0 : index
    %17 = vector.load %arg6[%c0_12, %c0_13] : memref<512x128xbf16, #tpu.memory_space<vmem>>, vector<512x128xbf16>
    %cst_14 = arith.constant dense<0.000000e+00> : vector<2x128xf32>
    %18 = tpu.matmul %16, %17, %cst_14 {dimension_numbers = #tpu.dot_dimension_numbers<[1], [0], [0], [1], [0, 0, 1, 1], [], []>} : vector<2x512xbf16>, vector<512x128xbf16>, vector<2x128xf32> -> vector<2x128xf32>
    %c0_15 = arith.constant 0 : index
    %c0_16 = arith.constant 0 : index
    %19 = vector.load %arg7[%c0_15, %c0_16] : memref<1x128xf32, #tpu.memory_space<vmem>>, vector<1x128xf32>
    %20 = vector.broadcast %19 : vector<1x128xf32> to vector<2x128xf32>
    %21 = arith.addf %18, %20 : vector<2x128xf32>
    %22 = arith.negf %21 : vector<2x128xf32>
    %23 = math.exp %22 : vector<2x128xf32>
    %cst_17 = arith.constant 1.000000e+00 : f32
    %24 = vector.broadcast %cst_17 : f32 to vector<2x128xf32>
    %25 = arith.addf %24, %23 : vector<2x128xf32>
    %26 = arith.divf %24, %25 : vector<2x128xf32>
    %cst_18 = arith.constant 4.000000e+00 : f32
    %27 = vector.broadcast %cst_18 : f32 to vector<2x128xf32>
    %28 = arith.mulf %27, %26 : vector<2x128xf32>
    %cst_19 = arith.constant -2.000000e+00 : f32
    %29 = vector.broadcast %cst_19 : f32 to vector<2x128xf32>
    %30 = arith.addf %28, %29 : vector<2x128xf32>
    %c0_20 = arith.constant 0 : index
    %c0_21 = arith.constant 0 : index
    %31 = vector.load %arg8[%c0_20, %c0_21] : memref<2x128xf32, #tpu.memory_space<vmem>>, vector<2x128xf32>
    tpu.vector_store %arg8[%c0_20, %c0_21], %30 {strides = array<i32>} : memref<2x128xf32, #tpu.memory_space<vmem>>, vector<2x128xf32>,
    return
  }
  func.func @transform_0(%arg0: i32) -> (i32, i32) {
    %c0_i32 = arith.constant 0 : i32
    %c0_i32_0 = arith.constant 0 : i32
    %c0_i32_1 = arith.constant 0 : i32
    return %c0_i32, %c0_i32_0 : i32, i32
  }
  func.func @transform_1(%arg0: i32) -> (i32, i32) {
    %c0_i32 = arith.constant 0 : i32
    %c0_i32_0 = arith.constant 0 : i32
    %c0_i32_1 = arith.constant 0 : i32
    return %c0_i32, %c0_i32_0 : i32, i32
  }
  func.func @transform_2(%arg0: i32) -> (i32, i32) {
    %c0_i32 = arith.constant 0 : i32
    %c0_i32_0 = arith.constant 0 : i32
    %c0_i32_1 = arith.constant 0 : i32
    return %c0_i32, %c0_i32_0 : i32, i32
  }
  func.func @transform_3(%arg0: i32) -> (i32, i32) {
    %c0_i32 = arith.constant 0 : i32
    %c0_i32_0 = arith.constant 0 : i32
    %c0_i32_1 = arith.constant 0 : i32
    return %c0_i32, %c0_i32_0 : i32, i32
  }
  func.func @transform_4(%arg0: i32) -> (i32, i32) {
    %c0_i32 = arith.constant 0 : i32
    %c0_i32_0 = arith.constant 0 : i32
    %c0_i32_1 = arith.constant 0 : i32
    return %c0_i32, %c0_i32_0 : i32, i32
  }
  func.func @transform_5(%arg0: i32) -> (i32, i32) {
    %c0_i32 = arith.constant 0 : i32
    %c0_i32_0 = arith.constant 0 : i32
    %c0_i32_1 = arith.constant 0 : i32
    return %c0_i32, %c0_i32_0 : i32, i32
  }
  func.func @transform_6(%arg0: i32) -> (i32, i32) {
    %c0_i32 = arith.constant 0 : i32
    %c0_i32_0 = arith.constant 0 : i32
    %c0_i32_1 = arith.constant 0 : i32
    return %c0_i32, %c0_i32_0 : i32, i32
  }
  func.func @transform_7(%arg0: i32) -> (i32, i32) {
    %c0_i32 = arith.constant 0 : i32
    %c0_i32_0 = arith.constant 0 : i32
    %c0_i32_1 = arith.constant 0 : i32
    return %c0_i32, %c0_i32_0 : i32, i32
  }
}

</mosaic_0001>

<llo_original>
// kernel: tpu_custom_call.1
$region0: #{tpu_custom_call.1}
  #allocation0 [shape = 'u32[]', space=smem, size = 0x4, offset = 0x4, fixed_abs, tag = 'smem constant byte address 0x4 - core index']
  #allocation1 [shape = 'u32[144,128]{1,0:T(1,128)}', space=vmem, size = 0x12000, scoped, tag = 'internal scratch']
  %s0 = inlined_call_operand.hbm [shape: f32[2,8], index: 0, kind: input, shape index: {}]
  %s1 = inlined_call_operand.hbm [shape: f32[8,256], index: 1, kind: input, shape index: {}]
  %s2 = inlined_call_operand.vmem [shape: f32[1,256], index: 2, kind: input, shape index: {}]
  %s3 = inlined_call_operand.hbm [shape: bf16[256,512], index: 3, kind: input, shape index: {}]
  %s4 = inlined_call_operand.vmem [shape: f32[1,512], index: 4, kind: input, shape index: {}]
  %s5 = inlined_call_operand.hbm [shape: bf16[512,128], index: 5, kind: input, shape index: {}]
  %s6 = inlined_call_operand.vmem [shape: f32[1,128], index: 6, kind: input, shape index: {}]
  %s7 = inlined_call_operand.hbm [shape: f32[2,128], index: 7, kind: output, shape index: {}]
  %s8 = sld [smem:[#allocation0]]
  $region54: #{tpu_custom_call.1} parent=0
    _
  %s10 = ssub.s32 1, %s8
  %s11 = scalar_select 0, %s10, %s8
  $region1: #{tpu_custom_call.1} parent=0
    #allocation2 [shape = 'u8[1024]{0}', space=vmem, size = 0x400, scoped, tag = 'input window, operand 0, single buffered']
    #allocation3 [shape = 's32[1]{0}', space=sflag, size = 0x4, scoped, tag = 'scoped memory for tpu_custom_call.1']
    #allocation4 [shape = 's32[1]{0}', space=sflag, size = 0x4, scoped, tag = 'scoped memory for tpu_custom_call.1']
    #allocation5 [shape = 'u8[8192]{0}', space=vmem, size = 0x2000, scoped, tag = 'input window, operand 1, single buffered']
    #allocation6 [shape = 's32[1]{0}', space=sflag, size = 0x4, scoped, tag = 'scoped memory for tpu_custom_call.1']
    #allocation7 [shape = 'u8[262144]{0}', space=vmem, size = 0x40000, scoped, tag = 'input window, operand 3, single buffered']
    #allocation8 [shape = 'u8[131072]{0}', space=vmem, size = 0x20000, scoped, tag = 'input window, operand 5, single buffered']
    #allocation9 [shape = 's32[1]{0}', space=sflag, size = 0x4, scoped, tag = 'scoped memory for tpu_custom_call.1']
    #allocation10 [shape = 'u8[1024]{0}', space=vmem, size = 0x400, scoped, tag = 'output window, operand 0, single buffered']
    %12 = vsyncpa [#allocation3], 0
    %13 = vsyncpa [#allocation6], 0
    %14 = vsyncpa [#allocation9], 0
    %15 = vsyncpa [#allocation4], 0
    // Predicated region
    $region2: #{tpu_custom_call.1} parent=1 // pred_check
      _
    $region3: #{tpu_custom_call.1} parent=1 // pred_check_branch
      %17 = sbr.rel (0) target = $region5
    $region4: #{tpu_custom_call.1} parent=1 // pred_region
      %s19 = ssub.s32 32, 32
      %20 = vsyncadd [#allocation3], %s19
      %s22 = sshll.u32 [#allocation2], 4
      %s23 = int_to_ptr.vmem [resolvable:$true] %s22
      %25 = dma.hbm_to_vmem [thread:$0]  %s0, 32, %s23, [#allocation3]
    $region5: #{tpu_custom_call.1} parent=1 // pred_fallthru
      _
    // Predicated region
    $region6: #{tpu_custom_call.1} parent=1 // pred_check
      _
    $region7: #{tpu_custom_call.1} parent=1 // pred_check_branch
      %27 = sbr.rel (0) target = $region9
    $region8: #{tpu_custom_call.1} parent=1 // pred_region
      %s29 = ssub.s32 256, 256
      %30 = vsyncadd [#allocation6], %s29
      %s32 = sshll.u32 [#allocation5], 4
      %s33 = int_to_ptr.vmem [resolvable:$true] %s32
      %35 = dma.hbm_to_vmem [thread:$0]  %s1, 256, %s33, [#allocation6]
    $region9: #{tpu_custom_call.1} parent=1 // pred_fallthru
      _
    // Predicated region
    $region10: #{tpu_custom_call.1} parent=1 // pred_check
      _
    $region11: #{tpu_custom_call.1} parent=1 // pred_check_branch
      %37 = sbr.rel (0) target = $region13
    $region12: #{tpu_custom_call.1} parent=1 // pred_region
      _
    $region13: #{tpu_custom_call.1} parent=1 // pred_fallthru
      _
    // Predicated region
    $region14: #{tpu_custom_call.1} parent=1 // pred_check
      _
    $region15: #{tpu_custom_call.1} parent=1 // pred_check_branch
      %39 = sbr.rel (0) target = $region17
    $region16: #{tpu_custom_call.1} parent=1 // pred_region
      %s41 = ssub.s32 8192, 8192
      %42 = vsyncadd [#allocation6], %s41
      %s43 = sshll.u32 [#allocation7], 4
      %s44 = int_to_ptr.vmem [resolvable:$true] %s43
      %49 = dma.hbm_to_vmem [thread:$0]  %s3, 8192, %s44, [#allocation6], 256, 256, 16
    $region17: #{tpu_custom_call.1} parent=1 // pred_fallthru
      _
    // Predicated region
    $region18: #{tpu_custom_call.1} parent=1 // pred_check
      _
    $region19: #{tpu_custom_call.1} parent=1 // pred_check_branch
      %51 = sbr.rel (0) target = $region21
    $region20: #{tpu_custom_call.1} parent=1 // pred_region
      _
    $region21: #{tpu_custom_call.1} parent=1 // pred_fallthru
      _
    // Predicated region
    $region22: #{tpu_custom_call.1} parent=1 // pred_check
      _
    $region23: #{tpu_custom_call.1} parent=1 // pred_check_branch
      %53 = sbr.rel (0) target = $region25
    $region24: #{tpu_custom_call.1} parent=1 // pred_region
      %s55 = ssub.s32 4096, 4096
      %56 = vsyncadd [#allocation9], %s55
      %s57 = sshll.u32 [#allocation8], 4
      %s58 = int_to_ptr.vmem [resolvable:$true] %s57
      %63 = dma.hbm_to_vmem [thread:$0]  %s5, 4096, %s58, [#allocation9], 64, 64, 4
    $region25: #{tpu_custom_call.1} parent=1 // pred_fallthru
      _
    // Predicated region
    $region26: #{tpu_custom_call.1} parent=1 // pred_check
      _
    $region27: #{tpu_custom_call.1} parent=1 // pred_check_branch
      %65 = sbr.rel (0) target = $region29
    $region28: #{tpu_custom_call.1} parent=1 // pred_region
      _
    $region29: #{tpu_custom_call.1} parent=1 // pred_fallthru
      _
    // Predicated region
    $region30: #{tpu_custom_call.1} parent=1 // pred_check
      _
    $region31: #{tpu_custom_call.1} parent=1 // pred_check_branch
      %67 = sbr.rel (0) target = $region33
    $region32: #{tpu_custom_call.1} parent=1 // pred_region
      %68 = dma.done [#allocation3], 32
    $region33: #{tpu_custom_call.1} parent=1 // pred_fallthru
      _
    // Predicated region
    $region34: #{tpu_custom_call.1} parent=1 // pred_check
      _
    $region35: #{tpu_custom_call.1} parent=1 // pred_check_branch
      %70 = sbr.rel (0) target = $region37
    $region36: #{tpu_custom_call.1} parent=1 // pred_region
      %71 = dma.done [#allocation6], 256
    $region37: #{tpu_custom_call.1} parent=1 // pred_fallthru
      _
    // Predicated region
    $region38: #{tpu_custom_call.1} parent=1 // pred_check
      _
    $region39: #{tpu_custom_call.1} parent=1 // pred_check_branch
      %73 = sbr.rel (0) target = $region41
    $region40: #{tpu_custom_call.1} parent=1 // pred_region
      %74 = dma.done [#allocation6], 8192
    $region41: #{tpu_custom_call.1} parent=1 // pred_fallthru
      _
    // Predicated region
    $region42: #{tpu_custom_call.1} parent=1 // pred_check
      _
    $region43: #{tpu_custom_call.1} parent=1 // pred_check_branch
      %76 = sbr.rel (0) target = $region45
    $region44: #{tpu_custom_call.1} parent=1 // pred_region
      %77 = dma.done [#allocation9], 4096
    $region45: #{tpu_custom_call.1} parent=1 // pred_fallthru
      _
    %v79 = vld [vmem:[#allocation2] sm:$0x3]
    %v80 = vld [vmem:[#allocation5] sm:$0xff]
    %v81 = vld [vmem:[#allocation5 + $0x8] sm:$0xff]
    %v82 = vld [vmem:[%s2] sm:$0x3]
    %v84 = vlaneseq
    %v85 = vshrl.u32 %v84, 7
    %v86 = vsub.s32 0, %v85
    %v87 = vrot.slane %v82, %v86
    %v88 = vlaneseq
    %v89 = vshrl.u32 %v88, 7
    %v90 = vsub.s32 1, %v89
    %v91 = vrot.slane %v82, %v90
    %vm94 = vcmask 64512
    %v96 = vsel %vm94, %v79, 0
    %98 = vmatprep.subr.mxu0 0.0
    %99 = vmatpush1.msra.mxu0 0.0
    %100 = vmatprep.subr.mxu0 0.0
    %101 = vmatpush1.msra.mxu0 0.0
    %102 = vmatprep.subr.mxu0 0.0
    %103 = vmatpush1.msra.mxu0 0.0
    %104 = vmatprep.subr.mxu0 0.0
    %105 = vmatpush1.msra.mxu0 0.0
    %106 = vmatprep.subr.mxu0 0.0
    %107 = vmatpush1.msra.mxu0 0.0
    %108 = vmatprep.subr.mxu0 0.0
    %109 = vmatpush1.msra.mxu0 0.0
    %110 = vmatprep.subr.mxu0 0.0
    %111 = vmatpush1.msra.mxu0 0.0
    %112 = vmatprep.subr.mxu0 0.0
    %113 = vmatpush1.msra.mxu0 0.0
    %114 = vmatprep.subr.mxu0 0.0
    %115 = vmatpush1.msra.mxu0 0.0
    %116 = vmatprep.subr.mxu0 0.0
    %117 = vmatpush1.msra.mxu0 0.0
    %118 = vmatprep.subr.mxu0 0.0
    %119 = vmatpush1.msra.mxu0 0.0
    %120 = vmatprep.subr.mxu0 0.0
    %121 = vmatpush1.msra.mxu0 0.0
    %122 = vmatprep.subr.mxu0 0.0
    %123 = vmatpush1.msra.mxu0 0.0
    %124 = vmatprep.subr.mxu0 0.0
    %125 = vmatpush1.msra.mxu0 0.0
    %126 = vmatprep.subr.mxu0 0.0
    %127 = vmatpush1.msra.mxu0 0.0
    %128 = vmatprep.subr.mxu0 %v81
    %129 = vmatpush1.msra.mxu0 %v80
    %130 = vmatprep.subr.mxu0 0.0
    %131 = vmatpush2.msra.mxu0 0.0
    %132 = vmatprep.subr.mxu0 0.0
    %133 = vmatpush2.msra.mxu0 0.0
    %134 = vmatprep.subr.mxu0 0.0
    %135 = vmatpush2.msra.mxu0 0.0
    %136 = vmatprep.subr.mxu0 0.0
    %137 = vmatpush2.msra.mxu0 0.0
    %138 = vmatprep.subr.mxu0 0.0
    %139 = vmatpush2.msra.mxu0 0.0
    %140 = vmatprep.subr.mxu0 0.0
    %141 = vmatpush2.msra.mxu0 0.0
    %142 = vmatprep.subr.mxu0 0.0
    %143 = vmatpush2.msra.mxu0 0.0
    %144 = vmatprep.subr.mxu0 0.0
    %145 = vmatpush2.msra.mxu0 0.0
    %146 = vmatprep.subr.mxu0 0.0
    %147 = vmatpush2.msra.mxu0 0.0
    %148 = vmatprep.subr.mxu0 0.0
    %149 = vmatpush2.msra.mxu0 0.0
    %150 = vmatprep.subr.mxu0 0.0
    %151 = vmatpush2.msra.mxu0 0.0
    %152 = vmatprep.subr.mxu0 0.0
    %153 = vmatpush2.msra.mxu0 0.0
    %154 = vmatprep.subr.mxu0 0.0
    %155 = vmatpush2.msra.mxu0 0.0
    %156 = vmatprep.subr.mxu0 0.0
    %157 = vmatpush2.msra.mxu0 0.0
    %158 = vmatprep.subr.mxu0 0.0
    %159 = vmatpush2.msra.mxu0 0.0
    %160 = vmatprep.subr.mxu0 0.0
    %161 = vmatpush2.msra.mxu0 0.0
    %162 = vmatprep.mubr.f32.mxu0 0.0
    %163 = vmatmul.mubr.f32.gmra.mxu0 %v96
    %v164 = vpop.f32.mrf.mxu0
    %v165 = vadd.f32 %v87, %v164
    %v166 = vpop.f32.mrf.mxu0
    %v167 = vadd.f32 %v91, %v166
    %168 = vdwg.mxu0
    %v169 = vmax.f32 %v165, 0.0
    %v170 = vmax.f32 %v167, 0.0
    %v171 = vpack.c.bf16 %v169, %v169
    %v172 = vpack.c.bf16 %v170, %v170
    %v173 = vld [vmem:[#allocation7] sm:$0xff]
    %v174 = vld [vmem:[#allocation7 + $0x8] sm:$0xff]
    %v175 = vld [vmem:[#allocation7 + $0x10] sm:$0xff]
    %v176 = vld [vmem:[#allocation7 + $0x18] sm:$0xff]
    %v177 = vld [vmem:[#allocation7 + $0x20] sm:$0xff]
    %v178 = vld [vmem:[#allocation7 + $0x28] sm:$0xff]
    %v179 = vld [vmem:[#allocation7 + $0x30] sm:$0xff]
    %v180 = vld [vmem:[#allocation7 + $0x38] sm:$0xff]
    %v181 = vld [vmem:[#allocation7 + $0x40] sm:$0xff]
    %v182 = vld [vmem:[#allocation7 + $0x48] sm:$0xff]
    %v183 = vld [vmem:[#allocation7 + $0x50] sm:$0xff]
    %v184 = vld [vmem:[#allocation7 + $0x58] sm:$0xff]
    %v185 = vld [vmem:[#allocation7 + $0x60] sm:$0xff]
    %v186 = vld [vmem:[#allocation7 + $0x68] sm:$0xff]
    %v187 = vld [vmem:[#allocation7 + $0x70] sm:$0xff]
    %v188 = vld [vmem:[#allocation7 + $0x78] sm:$0xff]
    %v189 = vld [vmem:[#allocation7 + $0x80] sm:$0xff]
    %v190 = vld [vmem:[#allocation7 + $0x88] sm:$0xff]
    %v191 = vld [vmem:[#allocation7 + $0x90] sm:$0xff]
    %v192 = vld [vmem:[#allocation7 + $0x98] sm:$0xff]
    %v193 = vld [vmem:[#allocation7 + $0xa0] sm:$0xff]
    %v194 = vld [vmem:[#allocation7 + $0xa8] sm:$0xff]
    %v195 = vld [vmem:[#allocation7 + $0xb0] sm:$0xff]
    %v196 = vld [vmem:[#allocation7 + $0xb8] sm:$0xff]
    %v197 = vld [vmem:[#allocation7 + $0xc0] sm:$0xff]
    %v198 = vld [vmem:[#allocation7 + $0xc8] sm:$0xff]
    %v199 = vld [vmem:[#allocation7 + $0xd0] sm:$0xff]
    %v200 = vld [vmem:[#allocation7 + $0xd8] sm:$0xff]
    %v201 = vld [vmem:[#allocation7 + $0xe0] sm:$0xff]
    %v202 = vld [vmem:[#allocation7 + $0xe8] sm:$0xff]
    %v203 = vld [vmem:[#allocation7 + $0xf0] sm:$0xff]
    %v204 = vld [vmem:[#allocation7 + $0xf8] sm:$0xff]
    %v205 = vld [vmem:[#allocation7 + $0x100] sm:$0xff]
    %v206 = vld [vmem:[#allocation7 + $0x108] sm:$0xff]
    %v207 = vld [vmem:[#allocation7 + $0x110] sm:$0xff]
    %v208 = vld [vmem:[#allocation7 + $0x118] sm:$0xff]
    %v209 = vld [vmem:[#allocation7 + $0x120] sm:$0xff]
    %v210 = vld [vmem:[#allocation7 + $0x128] sm:$0xff]
    %v211 = vld [vmem:[#allocation7 + $0x130] sm:$0xff]
    %v212 = vld [vmem:[#allocation7 + $0x138] sm:$0xff]
    %v213 = vld [vmem:[#allocation7 + $0x140] sm:$0xff]
    %v214 = vld [vmem:[#allocation7 + $0x148] sm:$0xff]
    %v215 = vld [vmem:[#allocation7 + $0x150] sm:$0xff]
    %v216 = vld [vmem:[#allocation7 + $0x158] sm:$0xff]
    %v217 = vld [vmem:[#allocation7 + $0x160] sm:$0xff]
    %v218 = vld [vmem:[#allocation7 + $0x168] sm:$0xff]
    %v219 = vld [vmem:[#allocation7 + $0x170] sm:$0xff]
    %v220 = vld [vmem:[#allocation7 + $0x178] sm:$0xff]
    %v221 = vld [vmem:[#allocation7 + $0x180] sm:$0xff]
    %v222 = vld [vmem:[#allocation7 + $0x188] sm:$0xff]
    %v223 = vld [vmem:[#allocation7 + $0x190] sm:$0xff]
    %v224 = vld [vmem:[#allocation7 + $0x198] sm:$0xff]
    %v225 = vld [vmem:[#allocation7 + $0x1a0] sm:$0xff]
    %v226 = vld [vmem:[#allocation7 + $0x1a8] sm:$0xff]
    %v227 = vld [vmem:[#allocation7 + $0x1b0] sm:$0xff]
    %v228 = vld [vmem:[#allocation7 + $0x1b8] sm:$0xff]
    %v229 = vld [vmem:[#allocation7 + $0x1c0] sm:$0xff]
    %v230 = vld [vmem:[#allocation7 + $0x1c8] sm:$0xff]
    %v231 = vld [vmem:[#allocation7 + $0x1d0] sm:$0xff]
    %v232 = vld [vmem:[#allocation7 + $0x1d8] sm:$0xff]
    %v233 = vld [vmem:[#allocation7 + $0x1e0] sm:$0xff]
    %v234 = vld [vmem:[#allocation7 + $0x1e8] sm:$0xff]
    %v235 = vld [vmem:[#allocation7 + $0x1f0] sm:$0xff]
    %v236 = vld [vmem:[#allocation7 + $0x1f8] sm:$0xff]
    %v237 = vld [vmem:[%s4] sm:$0xf]
    %v239 = vlaneseq
    %v240 = vshrl.u32 %v239, 7
    %v241 = vsub.s32 0, %v240
    %v242 = vrot.slane %v237, %v241
    %v243 = vlaneseq
    %v244 = vshrl.u32 %v243, 7
    %v245 = vsub.s32 1, %v244
    %v246 = vrot.slane %v237, %v245
    %v247 = vlaneseq
    %v248 = vshrl.u32 %v247, 7
    %v249 = vsub.s32 2, %v248
    %v250 = vrot.slane %v237, %v249
    %v251 = vlaneseq
    %v252 = vshrl.u32 %v251, 7
    %v253 = vsub.s32 3, %v252
    %v254 = vrot.slane %v237, %v253
    %v323 = vunpack.c.l.b16 %v173
    %v324 = vunpack.c.h.b16 %v173
    %v325 = vunpack.c.l.b16 %v174
    %v326 = vunpack.c.h.b16 %v174
    %v327 = vunpack.c.l.b16 %v175
    %v328 = vunpack.c.h.b16 %v175
    %v329 = vunpack.c.l.b16 %v176
    %v330 = vunpack.c.h.b16 %v176
    %v331 = vunpack.c.l.b16 %v177
    %v332 = vunpack.c.h.b16 %v177
    %v333 = vunpack.c.l.b16 %v178
    %v334 = vunpack.c.h.b16 %v178
    %v335 = vunpack.c.l.b16 %v179
    %v336 = vunpack.c.h.b16 %v179
    %v337 = vunpack.c.l.b16 %v180
    %v338 = vunpack.c.h.b16 %v180
    %v339 = vunpack.c.l.b16 %v181
    %v340 = vunpack.c.h.b16 %v181
    %v341 = vunpack.c.l.b16 %v182
    %v342 = vunpack.c.h.b16 %v182
    %v343 = vunpack.c.l.b16 %v183
    %v344 = vunpack.c.h.b16 %v183
    %v345 = vunpack.c.l.b16 %v184
    %v346 = vunpack.c.h.b16 %v184
    %v347 = vunpack.c.l.b16 %v185
    %v348 = vunpack.c.h.b16 %v185
    %v349 = vunpack.c.l.b16 %v186
    %v350 = vunpack.c.h.b16 %v186
    %v351 = vunpack.c.l.b16 %v187
    %v352 = vunpack.c.h.b16 %v187
    %v353 = vunpack.c.l.b16 %v188
    %v354 = vunpack.c.h.b16 %v188
    %v355 = vunpack.c.l.b16 %v189
    %v356 = vunpack.c.h.b16 %v189
    %v357 = vunpack.c.l.b16 %v190
    %v358 = vunpack.c.h.b16 %v190
    %v359 = vunpack.c.l.b16 %v191
    %v360 = vunpack.c.h.b16 %v191
    %v361 = vunpack.c.l.b16 %v192
    %v362 = vunpack.c.h.b16 %v192
    %v363 = vunpack.c.l.b16 %v193
    %v364 = vunpack.c.h.b16 %v193
    %v365 = vunpack.c.l.b16 %v194
    %v366 = vunpack.c.h.b16 %v194
    %v367 = vunpack.c.l.b16 %v195
    %v368 = vunpack.c.h.b16 %v195
    %v369 = vunpack.c.l.b16 %v196
    %v370 = vunpack.c.h.b16 %v196
    %v371 = vunpack.c.l.b16 %v197
    %v372 = vunpack.c.h.b16 %v197
    %v373 = vunpack.c.l.b16 %v198
    %v374 = vunpack.c.h.b16 %v198
    %v375 = vunpack.c.l.b16 %v199
    %v376 = vunpack.c.h.b16 %v199
    %v377 = vunpack.c.l.b16 %v200
    %v378 = vunpack.c.h.b16 %v200
    %v379 = vunpack.c.l.b16 %v201
    %v380 = vunpack.c.h.b16 %v201
    %v381 = vunpack.c.l.b16 %v202
    %v382 = vunpack.c.h.b16 %v202
    %v383 = vunpack.c.l.b16 %v203
    %v384 = vunpack.c.h.b16 %v203
    %v385 = vunpack.c.l.b16 %v204
    %v386 = vunpack.c.h.b16 %v204
    %v387 = vunpack.c.l.b16 %v205
    %v388 = vunpack.c.h.b16 %v205
    %v389 = vunpack.c.l.b16 %v206
    %v390 = vunpack.c.h.b16 %v206
    %v391 = vunpack.c.l.b16 %v207
    %v392 = vunpack.c.h.b16 %v207
    %v393 = vunpack.c.l.b16 %v208
    %v394 = vunpack.c.h.b16 %v208
    %v395 = vunpack.c.l.b16 %v209
    %v396 = vunpack.c.h.b16 %v209
    %v397 = vunpack.c.l.b16 %v210
    %v398 = vunpack.c.h.b16 %v210
    %v399 = vunpack.c.l.b16 %v211
    %v400 = vunpack.c.h.b16 %v211
    %v401 = vunpack.c.l.b16 %v212
    %v402 = vunpack.c.h.b16 %v212
    %v403 = vunpack.c.l.b16 %v213
    %v404 = vunpack.c.h.b16 %v213
    %v405 = vunpack.c.l.b16 %v214
    %v406 = vunpack.c.h.b16 %v214
    %v407 = vunpack.c.l.b16 %v215
    %v408 = vunpack.c.h.b16 %v215
    %v409 = vunpack.c.l.b16 %v216
    %v410 = vunpack.c.h.b16 %v216
    %v411 = vunpack.c.l.b16 %v217
    %v412 = vunpack.c.h.b16 %v217
    %v413 = vunpack.c.l.b16 %v218
    %v414 = vunpack.c.h.b16 %v218
    %v415 = vunpack.c.l.b16 %v219
    %v416 = vunpack.c.h.b16 %v219
    %v417 = vunpack.c.l.b16 %v220
    %v418 = vunpack.c.h.b16 %v220
    %v419 = vunpack.c.l.b16 %v221
    %v420 = vunpack.c.h.b16 %v221
    %v421 = vunpack.c.l.b16 %v222
    %v422 = vunpack.c.h.b16 %v222
    %v423 = vunpack.c.l.b16 %v223
    %v424 = vunpack.c.h.b16 %v223
    %v425 = vunpack.c.l.b16 %v224
    %v426 = vunpack.c.h.b16 %v224
    %v427 = vunpack.c.l.b16 %v225
    %v428 = vunpack.c.h.b16 %v225
    %v429 = vunpack.c.l.b16 %v226
    %v430 = vunpack.c.h.b16 %v226
    %v431 = vunpack.c.l.b16 %v227
    %v432 = vunpack.c.h.b16 %v227
    %v433 = vunpack.c.l.b16 %v228
    %v434 = vunpack.c.h.b16 %v228
    %v435 = vunpack.c.l.b16 %v229
    %v436 = vunpack.c.h.b16 %v229
    %v437 = vunpack.c.l.b16 %v230
    %v438 = vunpack.c.h.b16 %v230
    %v439 = vunpack.c.l.b16 %v231
    %v440 = vunpack.c.h.b16 %v231
    %v441 = vunpack.c.l.b16 %v232
    %v442 = vunpack.c.h.b16 %v232
    %v443 = vunpack.c.l.b16 %v233
    %v444 = vunpack.c.h.b16 %v233
    %v445 = vunpack.c.l.b16 %v234
    %v446 = vunpack.c.h.b16 %v234
    %v447 = vunpack.c.l.b16 %v235
    %v448 = vunpack.c.h.b16 %v235
    %v449 = vunpack.c.l.b16 %v236
    %v450 = vunpack.c.h.b16 %v236
    %v451 = vpack.c.b16 %v327, %v323
    %v452 = vpack.c.b16 %v328, %v324
    %v453 = vpack.c.b16 %v329, %v325
    %v454 = vpack.c.b16 %v330, %v326
    %v455 = vpack.c.b16 %v335, %v331
    %v456 = vpack.c.b16 %v336, %v332
    %v457 = vpack.c.b16 %v337, %v333
    %v458 = vpack.c.b16 %v338, %v334
    %v459 = vpack.c.b16 %v343, %v339
    %v460 = vpack.c.b16 %v344, %v340
    %v461 = vpack.c.b16 %v345, %v341
    %v462 = vpack.c.b16 %v346, %v342
    %v463 = vpack.c.b16 %v351, %v347
    %v464 = vpack.c.b16 %v352, %v348
    %v465 = vpack.c.b16 %v353, %v349
    %v466 = vpack.c.b16 %v354, %v350
    %v467 = vpack.c.b16 %v359, %v355
    %v468 = vpack.c.b16 %v360, %v356
    %v469 = vpack.c.b16 %v361, %v357
    %v470 = vpack.c.b16 %v362, %v358
    %v471 = vpack.c.b16 %v367, %v363
    %v472 = vpack.c.b16 %v368, %v364
    %v473 = vpack.c.b16 %v369, %v365
    %v474 = vpack.c.b16 %v370, %v366
    %v475 = vpack.c.b16 %v375, %v371
    %v476 = vpack.c.b16 %v376, %v372
    %v477 = vpack.c.b16 %v377, %v373
    %v478 = vpack.c.b16 %v378, %v374
    %v479 = vpack.c.b16 %v383, %v379
    %v480 = vpack.c.b16 %v384, %v380
    %v481 = vpack.c.b16 %v385, %v381
    %v482 = vpack.c.b16 %v386, %v382
    %v483 = vpack.c.b16 %v391, %v387
    %v484 = vpack.c.b16 %v392, %v388
    %v485 = vpack.c.b16 %v393, %v389
    %v486 = vpack.c.b16 %v394, %v390
    %v487 = vpack.c.b16 %v399, %v395
    %v488 = vpack.c.b16 %v400, %v396
    %v489 = vpack.c.b16 %v401, %v397
    %v490 = vpack.c.b16 %v402, %v398
    %v491 = vpack.c.b16 %v407, %v403
    %v492 = vpack.c.b16 %v408, %v404
    %v493 = vpack.c.b16 %v409, %v405
    %v494 = vpack.c.b16 %v410, %v406
    %v495 = vpack.c.b16 %v415, %v411
    %v496 = vpack.c.b16 %v416, %v412
    %v497 = vpack.c.b16 %v417, %v413
    %v498 = vpack.c.b16 %v418, %v414
    %v499 = vpack.c.b16 %v423, %v419
    %v500 = vpack.c.b16 %v424, %v420
    %v501 = vpack.c.b16 %v425, %v421
    %v502 = vpack.c.b16 %v426, %v422
    %v503 = vpack.c.b16 %v431, %v427
    %v504 = vpack.c.b16 %v432, %v428
    %v505 = vpack.c.b16 %v433, %v429
    %v506 = vpack.c.b16 %v434, %v430
    %v507 = vpack.c.b16 %v439, %v435
    %v508 = vpack.c.b16 %v440, %v436
    %v509 = vpack.c.b16 %v441, %v437
    %v510 = vpack.c.b16 %v442, %v438
    %v511 = vpack.c.b16 %v447, %v443
    %v512 = vpack.c.b16 %v448, %v444
    %v513 = vpack.c.b16 %v449, %v445
    %v514 = vpack.c.b16 %v450, %v446
    %579 = vmatprep.subr.bf16.mxu0 %v480
    %580 = vmatpush1.bf16.msra.mxu0 %v479
    %581 = vmatprep.subr.bf16.mxu0 %v476
    %582 = vmatpush1.bf16.msra.mxu0 %v475
    %583 = vmatprep.subr.bf16.mxu0 %v472
    %584 = vmatpush1.bf16.msra.mxu0 %v471
    %585 = vmatprep.subr.bf16.mxu0 %v468
    %586 = vmatpush1.bf16.msra.mxu0 %v467
    %587 = vmatprep.subr.bf16.mxu0 %v464
    %588 = vmatpush1.bf16.msra.mxu0 %v463
    %589 = vmatprep.subr.bf16.mxu0 %v460
    %590 = vmatpush1.bf16.msra.mxu0 %v459
    %591 = vmatprep.subr.bf16.mxu0 %v456
    %592 = vmatpush1.bf16.msra.mxu0 %v455
    %593 = vmatprep.subr.bf16.mxu0 %v452
    %594 = vmatpush1.bf16.msra.mxu0 %v451
    %595 = vmatprep.subr.bf16.mxu0 %v512
    %596 = vmatpush2.bf16.msra.mxu0 %v511
    %597 = vmatprep.subr.bf16.mxu0 %v508
    %598 = vmatpush2.bf16.msra.mxu0 %v507
    %599 = vmatprep.subr.bf16.mxu0 %v504
    %600 = vmatpush2.bf16.msra.mxu0 %v503
    %601 = vmatprep.subr.bf16.mxu0 %v500
    %602 = vmatpush2.bf16.msra.mxu0 %v499
    %603 = vmatprep.subr.bf16.mxu0 %v496
    %604 = vmatpush2.bf16.msra.mxu0 %v495
    %605 = vmatprep.subr.bf16.mxu0 %v492
    %606 = vmatpush2.bf16.msra.mxu0 %v491
    %607 = vmatprep.subr.bf16.mxu0 %v488
    %608 = vmatpush2.bf16.msra.mxu0 %v487
    %609 = vmatprep.subr.bf16.mxu0 %v484
    %610 = vmatpush2.bf16.msra.mxu0 %v483
    %611 = vmatprep.mubr.bf16.mxu0 %v172
    %612 = vmatmul.mubr.bf16.gmra.mxu0 %v171
    %v613 = vpop.f32.mrf.mxu0
    %v614 = vadd.f32 %v242, %v613
    %v615 = vpop.f32.mrf.mxu0
    %v616 = vadd.f32 %v246, %v615
    %v617 = vpop.f32.mrf.mxu0
    %v618 = vpop.f32.mrf.mxu0
    %619 = vdwg.mxu0
    %620 = vmatprep.subr.bf16.mxu0 %v482
    %621 = vmatpush1.bf16.msra.mxu0 %v481
    %622 = vmatprep.subr.bf16.mxu0 %v478
    %623 = vmatpush1.bf16.msra.mxu0 %v477
    %624 = vmatprep.subr.bf16.mxu0 %v474
    %625 = vmatpush1.bf16.msra.mxu0 %v473
    %626 = vmatprep.subr.bf16.mxu0 %v470
    %627 = vmatpush1.bf16.msra.mxu0 %v469
    %628 = vmatprep.subr.bf16.mxu0 %v466
    %629 = vmatpush1.bf16.msra.mxu0 %v465
    %630 = vmatprep.subr.bf16.mxu0 %v462
    %631 = vmatpush1.bf16.msra.mxu0 %v461
    %632 = vmatprep.subr.bf16.mxu0 %v458
    %633 = vmatpush1.bf16.msra.mxu0 %v457
    %634 = vmatprep.subr.bf16.mxu0 %v454
    %635 = vmatpush1.bf16.msra.mxu0 %v453
    %636 = vmatprep.subr.bf16.mxu0 %v514
    %637 = vmatpush2.bf16.msra.mxu0 %v513
    %638 = vmatprep.subr.bf16.mxu0 %v510
    %639 = vmatpush2.bf16.msra.mxu0 %v509
    %640 = vmatprep.subr.bf16.mxu0 %v506
    %641 = vmatpush2.bf16.msra.mxu0 %v505
    %642 = vmatprep.subr.bf16.mxu0 %v502
    %643 = vmatpush2.bf16.msra.mxu0 %v501
    %644 = vmatprep.subr.bf16.mxu0 %v498
    %645 = vmatpush2.bf16.msra.mxu0 %v497
    %646 = vmatprep.subr.bf16.mxu0 %v494
    %647 = vmatpush2.bf16.msra.mxu0 %v493
    %648 = vmatprep.subr.bf16.mxu0 %v490
    %649 = vmatpush2.bf16.msra.mxu0 %v489
    %650 = vmatprep.subr.bf16.mxu0 %v486
    %651 = vmatpush2.bf16.msra.mxu0 %v485
    %652 = vmatprep.mubr.bf16.mxu0 %v172
    %653 = vmatmul.mubr.bf16.gmra.mxu0 %v171
    %v654 = vpop.f32.mrf.mxu0
    %v655 = vadd.f32 %v250, %v654
    %v656 = vpop.f32.mrf.mxu0
    %v657 = vadd.f32 %v254, %v656
    %v658 = vpop.f32.mrf.mxu0
    %v659 = vpop.f32.mrf.mxu0
    %660 = vdwg.mxu0
    %v661 = vmax.f32 %v614, 0.0
    %v662 = vmax.f32 %v616, 0.0
    %v663 = vmax.f32 %v655, 0.0
    %v664 = vmax.f32 %v657, 0.0
    %v665 = vpack.c.bf16 %v661, %v661
    %v666 = vpack.c.bf16 %v662, %v662
    %v667 = vpack.c.bf16 %v663, %v663
    %v668 = vpack.c.bf16 %v664, %v664
    %v669 = vld [vmem:[#allocation8] sm:$0xf]
    %v670 = vld [vmem:[#allocation8 + $0x4] sm:$0xf]
    %v671 = vld [vmem:[#allocation8 + $0x8] sm:$0xf]
    %v672 = vld [vmem:[#allocation8 + $0xc] sm:$0xf]
    %v673 = vld [vmem:[#allocation8 + $0x10] sm:$0xf]
    %v674 = vld [vmem:[#allocation8 + $0x14] sm:$0xf]
    %v675 = vld [vmem:[#allocation8 + $0x18] sm:$0xf]
    %v676 = vld [vmem:[#allocation8 + $0x1c] sm:$0xf]
    %v677 = vld [vmem:[#allocation8 + $0x20] sm:$0xf]
    %v678 = vld [vmem:[#allocation8 + $0x24] sm:$0xf]
    %v679 = vld [vmem:[#allocation8 + $0x28] sm:$0xf]
    %v680 = vld [vmem:[#allocation8 + $0x2c] sm:$0xf]
    %v681 = vld [vmem:[#allocation8 + $0x30] sm:$0xf]
    %v682 = vld [vmem:[#allocation8 + $0x34] sm:$0xf]
    %v683 = vld [vmem:[#allocation8 + $0x38] sm:$0xf]
    %v684 = vld [vmem:[#allocation8 + $0x3c] sm:$0xf]
    %v685 = vld [vmem:[#allocation8 + $0x40] sm:$0xf]
    %v686 = vld [vmem:[#allocation8 + $0x44] sm:$0xf]
    %v687 = vld [vmem:[#allocation8 + $0x48] sm:$0xf]
    %v688 = vld [vmem:[#allocation8 + $0x4c] sm:$0xf]
    %v689 = vld [vmem:[#allocation8 + $0x50] sm:$0xf]
    %v690 = vld [vmem:[#allocation8 + $0x54] sm:$0xf]
    %v691 = vld [vmem:[#allocation8 + $0x58] sm:$0xf]
    %v692 = vld [vmem:[#allocation8 + $0x5c] sm:$0xf]
    %v693 = vld [vmem:[#allocation8 + $0x60] sm:$0xf]
    %v694 = vld [vmem:[#allocation8 + $0x64] sm:$0xf]
    %v695 = vld [vmem:[#allocation8 + $0x68] sm:$0xf]
    %v696 = vld [vmem:[#allocation8 + $0x6c] sm:$0xf]
    %v697 = vld [vmem:[#allocation8 + $0x70] sm:$0xf]
    %v698 = vld [vmem:[#allocation8 + $0x74] sm:$0xf]
    %v699 = vld [vmem:[#allocation8 + $0x78] sm:$0xf]
    %v700 = vld [vmem:[#allocation8 + $0x7c] sm:$0xf]
    %v701 = vld [vmem:[#allocation8 + $0x80] sm:$0xf]
    %v702 = vld [vmem:[#allocation8 + $0x84] sm:$0xf]
    %v703 = vld [vmem:[#allocation8 + $0x88] sm:$0xf]
    %v704 = vld [vmem:[#allocation8 + $0x8c] sm:$0xf]
    %v705 = vld [vmem:[#allocation8 + $0x90] sm:$0xf]
    %v706 = vld [vmem:[#allocation8 + $0x94] sm:$0xf]
    %v707 = vld [vmem:[#allocation8 + $0x98] sm:$0xf]
    %v708 = vld [vmem:[#allocation8 + $0x9c] sm:$0xf]
    %v709 = vld [vmem:[#allocation8 + $0xa0] sm:$0xf]
    %v710 = vld [vmem:[#allocation8 + $0xa4] sm:$0xf]
    %v711 = vld [vmem:[#allocation8 + $0xa8] sm:$0xf]
    %v712 = vld [vmem:[#allocation8 + $0xac] sm:$0xf]
    %v713 = vld [vmem:[#allocation8 + $0xb0] sm:$0xf]
    %v714 = vld [vmem:[#allocation8 + $0xb4] sm:$0xf]
    %v715 = vld [vmem:[#allocation8 + $0xb8] sm:$0xf]
    %v716 = vld [vmem:[#allocation8 + $0xbc] sm:$0xf]
    %v717 = vld [vmem:[#allocation8 + $0xc0] sm:$0xf]
    %v718 = vld [vmem:[#allocation8 + $0xc4] sm:$0xf]
    %v719 = vld [vmem:[#allocation8 + $0xc8] sm:$0xf]
    %v720 = vld [vmem:[#allocation8 + $0xcc] sm:$0xf]
    %v721 = vld [vmem:[#allocation8 + $0xd0] sm:$0xf]
    %v722 = vld [vmem:[#allocation8 + $0xd4] sm:$0xf]
    %v723 = vld [vmem:[#allocation8 + $0xd8] sm:$0xf]
    %v724 = vld [vmem:[#allocation8 + $0xdc] sm:$0xf]
    %v725 = vld [vmem:[#allocation8 + $0xe0] sm:$0xf]
    %v726 = vld [vmem:[#allocation8 + $0xe4] sm:$0xf]
    %v727 = vld [vmem:[#allocation8 + $0xe8] sm:$0xf]
    %v728 = vld [vmem:[#allocation8 + $0xec] sm:$0xf]
    %v729 = vld [vmem:[#allocation8 + $0xf0] sm:$0xf]
    %v730 = vld [vmem:[#allocation8 + $0xf4] sm:$0xf]
    %v731 = vld [vmem:[#allocation8 + $0xf8] sm:$0xf]
    %v732 = vld [vmem:[#allocation8 + $0xfc] sm:$0xf]
    %v733 = vld [vmem:[%s6] sm:$0x1]
    %v735 = vlaneseq
    %v736 = vshrl.u32 %v735, 7
    %v737 = vsub.s32 0, %v736
    %v738 = vrot.slane %v733, %v737
    %v804 = vunpack.c.l.b16 %v669
    %v805 = vunpack.c.l.b16 %v670
    %v806 = vunpack.c.l.b16 %v671
    %v807 = vunpack.c.l.b16 %v672
    %v808 = vunpack.c.l.b16 %v673
    %v809 = vunpack.c.l.b16 %v674
    %v810 = vunpack.c.l.b16 %v675
    %v811 = vunpack.c.l.b16 %v676
    %v812 = vunpack.c.l.b16 %v677
    %v813 = vunpack.c.l.b16 %v678
    %v814 = vunpack.c.l.b16 %v679
    %v815 = vunpack.c.l.b16 %v680
    %v816 = vunpack.c.l.b16 %v681
    %v817 = vunpack.c.l.b16 %v682
    %v818 = vunpack.c.l.b16 %v683
    %v819 = vunpack.c.l.b16 %v684
    %v820 = vunpack.c.l.b16 %v685
    %v821 = vunpack.c.l.b16 %v686
    %v822 = vunpack.c.l.b16 %v687
    %v823 = vunpack.c.l.b16 %v688
    %v824 = vunpack.c.l.b16 %v689
    %v825 = vunpack.c.l.b16 %v690
    %v826 = vunpack.c.l.b16 %v691
    %v827 = vunpack.c.l.b16 %v692
    %v828 = vunpack.c.l.b16 %v693
    %v829 = vunpack.c.l.b16 %v694
    %v830 = vunpack.c.l.b16 %v695
    %v831 = vunpack.c.l.b16 %v696
    %v832 = vunpack.c.l.b16 %v697
    %v833 = vunpack.c.l.b16 %v698
    %v834 = vunpack.c.l.b16 %v699
    %v835 = vunpack.c.l.b16 %v700
    %v836 = vunpack.c.l.b16 %v701
    %v837 = vunpack.c.l.b16 %v702
    %v838 = vunpack.c.l.b16 %v703
    %v839 = vunpack.c.l.b16 %v704
    %v840 = vunpack.c.l.b16 %v705
    %v841 = vunpack.c.l.b16 %v706
    %v842 = vunpack.c.l.b16 %v707
    %v843 = vunpack.c.l.b16 %v708
    %v844 = vunpack.c.l.b16 %v709
    %v845 = vunpack.c.l.b16 %v710
    %v846 = vunpack.c.l.b16 %v711
    %v847 = vunpack.c.l.b16 %v712
    %v848 = vunpack.c.l.b16 %v713
    %v849 = vunpack.c.l.b16 %v714
    %v850 = vunpack.c.l.b16 %v715
    %v851 = vunpack.c.l.b16 %v716
    %v852 = vunpack.c.l.b16 %v717
    %v853 = vunpack.c.l.b16 %v718
    %v854 = vunpack.c.l.b16 %v719
    %v855 = vunpack.c.l.b16 %v720
    %v856 = vunpack.c.l.b16 %v721
    %v857 = vunpack.c.l.b16 %v722
    %v858 = vunpack.c.l.b16 %v723
    %v859 = vunpack.c.l.b16 %v724
    %v860 = vunpack.c.l.b16 %v725
    %v861 = vunpack.c.l.b16 %v726
    %v862 = vunpack.c.l.b16 %v727
    %v863 = vunpack.c.l.b16 %v728
    %v864 = vunpack.c.l.b16 %v729
    %v865 = vunpack.c.l.b16 %v730
    %v866 = vunpack.c.l.b16 %v731
    %v867 = vunpack.c.l.b16 %v732
    %v868 = vpack.c.b16 %v805, %v804
    %v869 = vpack.c.b16 %v807, %v806
    %v870 = vpack.c.b16 %v809, %v808
    %v871 = vpack.c.b16 %v811, %v810
    %v872 = vpack.c.b16 %v813, %v812
    %v873 = vpack.c.b16 %v815, %v814
    %v874 = vpack.c.b16 %v817, %v816
    %v875 = vpack.c.b16 %v819, %v818
    %v876 = vpack.c.b16 %v821, %v820
    %v877 = vpack.c.b16 %v823, %v822
    %v878 = vpack.c.b16 %v825, %v824
    %v879 = vpack.c.b16 %v827, %v826
    %v880 = vpack.c.b16 %v829, %v828
    %v881 = vpack.c.b16 %v831, %v830
    %v882 = vpack.c.b16 %v833, %v832
    %v883 = vpack.c.b16 %v835, %v834
    %v884 = vpack.c.b16 %v837, %v836
    %v885 = vpack.c.b16 %v839, %v838
    %v886 = vpack.c.b16 %v841, %v840
    %v887 = vpack.c.b16 %v843, %v842
    %v888 = vpack.c.b16 %v845, %v844
    %v889 = vpack.c.b16 %v847, %v846
    %v890 = vpack.c.b16 %v849, %v848
    %v891 = vpack.c.b16 %v851, %v850
    %v892 = vpack.c.b16 %v853, %v852
    %v893 = vpack.c.b16 %v855, %v854
    %v894 = vpack.c.b16 %v857, %v856
    %v895 = vpack.c.b16 %v859, %v858
    %v896 = vpack.c.b16 %v861, %v860
    %v897 = vpack.c.b16 %v863, %v862
    %v898 = vpack.c.b16 %v865, %v864
    %v899 = vpack.c.b16 %v867, %v866
    %932 = vmatprep.subr.bf16.mxu0 0
    %933 = vmatpush1.bf16.msra.mxu0 %v875
    %934 = vmatprep.subr.bf16.mxu0 0
    %935 = vmatpush1.bf16.msra.mxu0 %v874
    %936 = vmatprep.subr.bf16.mxu0 0
    %937 = vmatpush1.bf16.msra.mxu0 %v873
    %938 = vmatprep.subr.bf16.mxu0 0
    %939 = vmatpush1.bf16.msra.mxu0 %v872
    %940 = vmatprep.subr.bf16.mxu0 0
    %941 = vmatpush1.bf16.msra.mxu0 %v871
    %942 = vmatprep.subr.bf16.mxu0 0
    %943 = vmatpush1.bf16.msra.mxu0 %v870
    %944 = vmatprep.subr.bf16.mxu0 0
    %945 = vmatpush1.bf16.msra.mxu0 %v869
    %946 = vmatprep.subr.bf16.mxu0 0
    %947 = vmatpush1.bf16.msra.mxu0 %v868
    %948 = vmatprep.subr.bf16.mxu0 0
    %949 = vmatpush2.bf16.msra.mxu0 %v883
    %950 = vmatprep.subr.bf16.mxu0 0
    %951 = vmatpush2.bf16.msra.mxu0 %v882
    %952 = vmatprep.subr.bf16.mxu0 0
    %953 = vmatpush2.bf16.msra.mxu0 %v881
    %954 = vmatprep.subr.bf16.mxu0 0
    %955 = vmatpush2.bf16.msra.mxu0 %v880
    %956 = vmatprep.subr.bf16.mxu0 0
    %957 = vmatpush2.bf16.msra.mxu0 %v879
    %958 = vmatprep.subr.bf16.mxu0 0
    %959 = vmatpush2.bf16.msra.mxu0 %v878
    %960 = vmatprep.subr.bf16.mxu0 0
    %961 = vmatpush2.bf16.msra.mxu0 %v877
    %962 = vmatprep.subr.bf16.mxu0 0
    %963 = vmatpush2.bf16.msra.mxu0 %v876
    %964 = vmatprep.mubr.bf16.mxu0 %v666
    %965 = vmatmul.mubr.bf16.gmra.mxu0 %v665
    %v966 = vpop.f32.mrf.mxu0
    %v967 = vadd.f32 %v738, %v966
    %v968 = vpop.f32.mrf.mxu0
    %v969 = vpop.f32.mrf.mxu0
    %v970 = vpop.f32.mrf.mxu0
    %971 = vdwg.mxu0
    %972 = vmatprep.subr.bf16.mxu0 0
    %973 = vmatpush1.bf16.msra.mxu0 %v891
    %974 = vmatprep.subr.bf16.mxu0 0
    %975 = vmatpush1.bf16.msra.mxu0 %v890
    %976 = vmatprep.subr.bf16.mxu0 0
    %977 = vmatpush1.bf16.msra.mxu0 %v889
    %978 = vmatprep.subr.bf16.mxu0 0
    %979 = vmatpush1.bf16.msra.mxu0 %v888
    %980 = vmatprep.subr.bf16.mxu0 0
    %981 = vmatpush1.bf16.msra.mxu0 %v887
    %982 = vmatprep.subr.bf16.mxu0 0
    %983 = vmatpush1.bf16.msra.mxu0 %v886
    %984 = vmatprep.subr.bf16.mxu0 0
    %985 = vmatpush1.bf16.msra.mxu0 %v885
    %986 = vmatprep.subr.bf16.mxu0 0
    %987 = vmatpush1.bf16.msra.mxu0 %v884
    %988 = vmatprep.subr.bf16.mxu0 0
    %989 = vmatpush2.bf16.msra.mxu0 %v899
    %990 = vmatprep.subr.bf16.mxu0 0
    %991 = vmatpush2.bf16.msra.mxu0 %v898
    %992 = vmatprep.subr.bf16.mxu0 0
    %993 = vmatpush2.bf16.msra.mxu0 %v897
    %994 = vmatprep.subr.bf16.mxu0 0
    %995 = vmatpush2.bf16.msra.mxu0 %v896
    %996 = vmatprep.subr.bf16.mxu0 0
    %997 = vmatpush2.bf16.msra.mxu0 %v895
    %998 = vmatprep.subr.bf16.mxu0 0
    %999 = vmatpush2.bf16.msra.mxu0 %v894
    %1000 = vmatprep.subr.bf16.mxu0 0
    %1001 = vmatpush2.bf16.msra.mxu0 %v893
    %1002 = vmatprep.subr.bf16.mxu0 0
    %1003 = vmatpush2.bf16.msra.mxu0 %v892
    %1004 = vmatprep.mubr.bf16.mxu0 %v668
    %1005 = vmatmul.mubr.bf16.gmra.mxu0 %v667
    %v1006 = vpop.f32.mrf.mxu0
    %v1007 = vadd.f32 %v967, %v1006
    %v1008 = vpop.f32.mrf.mxu0
    %v1009 = vpop.f32.mrf.mxu0
    %v1010 = vpop.f32.mrf.mxu0
    %1011 = vdwg.mxu0
    %v1012 = vxor.u32 %v1007, 2147483648
    %v1013 = vmul.f32 %v1012, 1.442695
    %v1014 = vpow.pop %v1013
    %v1015 = vadd.f32 %v1014, 1.0
    %v1016 = vrcp.pop %v1015
    %v1017 = vmul.f32 1.0, %v1016
    %v1018 = vmul.f32 %v1017, 4.0
    %v1019 = vadd.f32 %v1018, -2.0
    %1020 = vst [vmem:[#allocation10] sm:$0x3] %v1019
    // Predicated region
    $region46: #{tpu_custom_call.1} parent=1 // pred_check
      _
    $region47: #{tpu_custom_call.1} parent=1 // pred_check_branch
      %1022 = sbr.rel (0) target = $region49
    $region48: #{tpu_custom_call.1} parent=1 // pred_region
      %s1024 = ssub.s32 32, 32
      %1025 = vsyncadd [#allocation4], %s1024
      %s1027 = sshll.u32 [#allocation10], 4
      %s1028 = int_to_ptr.vmem [resolvable:$true] %s1027
      %1030 = dma.vmem_to_hbm [thread:$0]  %s1028, 32, %s7, [#allocation4]
    $region49: #{tpu_custom_call.1} parent=1 // pred_fallthru
      _
    // Predicated region
    $region50: #{tpu_custom_call.1} parent=1 // pred_check
      _
    $region51: #{tpu_custom_call.1} parent=1 // pred_check_branch
      %1032 = sbr.rel (0) target = $region53
    $region52: #{tpu_custom_call.1} parent=1 // pred_region
      %1033 = dma.done [#allocation4], 32
    $region53: #{tpu_custom_call.1} parent=1 // pred_fallthru
      _
    %1034 = vsyncpa [#allocation3], 1
    %1035 = vsyncpa [#allocation6], 1
    %1036 = vsyncpa [#allocation9], 1
    %1037 = vsyncpa [#allocation4], 1

</llo_original>
